<compile_context>
chip_gen: v7x
topology: tpu7x:2x2x1
jax: 0.10.0
libtpu: 0.0.40
codegen_flags: <defaults>
</compile_context>

<pallas_src>
import jax
import jax.numpy as jnp
from jax.experimental import pallas as pl
from jax.experimental.pallas import tpu as pltpu

# Logical (PyTorch) sizes.
IN_FEATURES, H1, H2, OUT_FEATURES = 4, 8, 9, 3
# Hidden dims padded to sublane-friendly sizes (zero padding exact through ReLU).
H1_PAD, H2_PAD = 8, 16
LANE = 128

# Rough per-batch-column VMEM cost: double-buffered x/out tiles (sublane-padded to
# 8 rows -> 32 B each, x2 buffers) plus the (8,tb) and (16,tb) f32 intermediates.
_BYTES_PER_BATCH_COL = 256
_MAX_TB = 64 * 1024   # 64K columns -> ~1 MiB input slab per grid step


def _round_up(n, m):
    return ((n + m - 1) // m) * m


def _vmem_capacity_bytes():
    try:
        cap = getattr(pltpu.get_tpu_info(), "vmem_capacity_bytes", None)
        if cap:
            return int(cap)
    except Exception:
        pass
    return 64 << 20   # conservative (v7x-sized) fallback


def _default_tb():
    budget = _vmem_capacity_bytes() // 4          # headroom for scratch / spills
    tb = (budget // _BYTES_PER_BATCH_COL) // LANE * LANE
    return max(LANE, min(tb, _MAX_TB))


def mlp_kernel(x_ref, w1_ref, b1_ref, w2_ref, b2_ref, w3_ref, b3_ref, o_ref):
    # x_ref: (IN_FEATURES, tb). Weights are (out_rows, in_rows); biases (out_rows, 1).
    x = x_ref[...]
    h = jnp.dot(w1_ref[...], x, preferred_element_type=jnp.float32) + b1_ref[...]
    h = jnp.maximum(h, 0.0)
    h = jnp.dot(w2_ref[...], h, preferred_element_type=jnp.float32) + b2_ref[...]
    h = jnp.maximum(h, 0.0)
    y = jnp.dot(w3_ref[...], h, preferred_element_type=jnp.float32) + b3_ref[...]
    o_ref[...] = y.astype(o_ref.dtype)


def init_params(key):
    """Deterministic init mimicking torch.nn.Linear (uniform +/- 1/sqrt(fan_in)).
    Torch layout: w is (fan_out, fan_in), b is (fan_out,)."""
    def linear(k, fan_in, fan_out):
        kw, kb = jax.random.split(k)
        bound = 1.0 / float(fan_in) ** 0.5
        w = jax.random.uniform(kw, (fan_out, fan_in), jnp.float32, -bound, bound)
        b = jax.random.uniform(kb, (fan_out,), jnp.float32, -bound, bound)
        return w, b

    k1, k2, k3 = jax.random.split(key, 3)
    w1, b1 = linear(k1, IN_FEATURES, H1)
    w2, b2 = linear(k2, H1, H2)
    w3, b3 = linear(k3, H2, OUT_FEATURES)
    return {"w1": w1, "b1": b1, "w2": w2, "b2": b2, "w3": w3, "b3": b3}


def pack_params(p):
    """Pack torch-layout params for the transposed (features, batch) kernel layout.
    Only hidden dims are padded; padding rows/cols are zero (exact through ReLU)."""
    w1p = p["w1"].astype(jnp.float32)                                        # (8, 4)
    b1p = p["b1"].astype(jnp.float32).reshape(H1_PAD, 1)                     # (8, 1)
    w2p = jnp.zeros((H2_PAD, H1_PAD), jnp.float32).at[:H2, :H1].set(p["w2"])  # (16, 8)
    b2p = jnp.zeros((H2_PAD, 1), jnp.float32).at[:H2, 0].set(p["b2"])         # (16, 1)
    w3p = jnp.zeros((OUT_FEATURES, H2_PAD), jnp.float32).at[:, :H2].set(p["w3"])  # (3, 16)
    b3p = p["b3"].astype(jnp.float32).reshape(OUT_FEATURES, 1)               # (3, 1)
    return w1p, b1p, w2p, b2p, w3p, b3p


def mlp_forward(x, packed, tb=None):
    """x: (B, IN_FEATURES) float32. packed: output of pack_params. -> (B, OUT_FEATURES)."""
    w1p, b1p, w2p, b2p, w3p, b3p = packed
    B = x.shape[0]
    b_lane = _round_up(max(B, 1), LANE)

    if tb is None:
        tb = _default_tb()
    tb = _round_up(min(int(tb), b_lane), LANE)          # lane-aligned batch tile
    # If the whole batch fits one tile but spans >= 2 lane groups, split into two
    # grid steps so a megacore (v7x) can shard the "parallel" axis across both TCs.
    if b_lane >= 2 * LANE and tb >= b_lane:
        tb = _round_up((b_lane + 1) // 2, LANE)
    b_pad = _round_up(b_lane, tb)
    grid = (b_pad // tb,)

    # Single fused transpose+pad: (B, 4) -> (4, b_pad), batch on the lane axis.
    x_t = jnp.pad(x.astype(jnp.float32).T, ((0, 0), (0, b_pad - B)))

    io_bytes = 4 * (x_t.size + OUT_FEATURES * b_pad
                    + w1p.size + b1p.size + w2p.size + b2p.size + w3p.size + b3p.size)
    flops = 2 * b_pad * (IN_FEATURES * H1 + H1 * H2 + H2 * OUT_FEATURES)
    cost = pl.CostEstimate(flops=int(flops), transcendentals=0,
                           bytes_accessed=int(io_bytes))

    vmem_limit = min(_vmem_capacity_bytes() // 2, 64 << 20)

    out_t = pl.pallas_call(
        mlp_kernel,
        out_shape=jax.ShapeDtypeStruct((OUT_FEATURES, b_pad), jnp.float32),
        grid_spec=pltpu.PrefetchScalarGridSpec(
            num_scalar_prefetch=0,
            grid=grid,
            in_specs=[
                pl.BlockSpec((IN_FEATURES, tb), lambda i: (0, i)),       # streamed x tile
                pl.BlockSpec((H1_PAD, IN_FEATURES), lambda i: (0, 0)),   # resident weights
                pl.BlockSpec((H1_PAD, 1), lambda i: (0, 0)),             # resident biases
                pl.BlockSpec((H2_PAD, H1_PAD), lambda i: (0, 0)),
                pl.BlockSpec((H2_PAD, 1), lambda i: (0, 0)),
                pl.BlockSpec((OUT_FEATURES, H2_PAD), lambda i: (0, 0)),
                pl.BlockSpec((OUT_FEATURES, 1), lambda i: (0, 0)),
            ],
            out_specs=pl.BlockSpec((OUT_FEATURES, tb), lambda i: (0, i)),
        ),
        compiler_params=pltpu.CompilerParams(
            dimension_semantics=("parallel",),
            vmem_limit_bytes=int(vmem_limit)),
        cost_estimate=cost,
    )(x_t, w1p, b1p, w2p, b2p, w3p, b3p)

    # Single slice+transpose back to (B, OUT_FEATURES).
    return out_t[:, :B].T


def mlp_ref(x, p):
    h = jnp.maximum(x @ p["w1"].T + p["b1"], 0.0)
    h = jnp.maximum(h @ p["w2"].T + p["b2"], 0.0)
    return h @ p["w3"].T + p["b3"]


if __name__ == "__main__":
    key = jax.random.PRNGKey(0)
    kx, kp, kx2 = jax.random.split(key, 3)
    params = init_params(kp)
    packed = pack_params(params)

    # Small shape implied by the module: batch=8, in_features=4.
    x = jax.random.normal(kx, (8, IN_FEATURES), jnp.float32)
    out = jax.block_until_ready(mlp_forward(x, packed))
    ref = mlp_ref(x, params)
    assert out.shape == (8, OUT_FEATURES)
    assert jnp.allclose(out, ref, atol=1e-5, rtol=1e-5), float(
        jnp.max(jnp.abs(out - ref)))

    # A non-multiple-of-128 batch exercises multi-step tiling, padding, megacore split.
    x2 = jax.random.normal(kx2, (300, IN_FEATURES), jnp.float32)
    out2 = jax.block_until_ready(mlp_forward(x2, packed))
    ref2 = mlp_ref(x2, params)
    assert out2.shape == (300, OUT_FEATURES)
    assert jnp.allclose(out2, ref2, atol=1e-5, rtol=1e-5), float(
        jnp.max(jnp.abs(out2 - ref2)))

    print("KERNEL_OK")
</pallas_src>

<mosaic_0001>
module attributes {stable_mosaic.version = 11 : i64} {
  func.func @mlp_kernel(%arg0: i32, %arg1: memref<4x128xf32, #tpu.memory_space<vmem>>, %arg2: memref<8x4xf32, #tpu.memory_space<vmem>>, %arg3: memref<8x1xf32, #tpu.memory_space<vmem>>, %arg4: memref<16x8xf32, #tpu.memory_space<vmem>>, %arg5: memref<16x1xf32, #tpu.memory_space<vmem>>, %arg6: memref<3x16xf32, #tpu.memory_space<vmem>>, %arg7: memref<3x1xf32, #tpu.memory_space<vmem>>, %arg8: memref<3x128xf32, #tpu.memory_space<vmem>>) attributes {dimension_semantics = [#tpu.dimension_semantics<parallel>], iteration_bounds = array<i64: 1>, scalar_prefetch = 0 : i64, scratch_operands = 0 : i64, tpu.core_type = #tpu.core_type<tc>, window_params = [{transform_indices = @transform_0, window_bounds = array<i64: 4, 128>}, {pipeline_mode = #tpu.pipeline_mode<synchronous>, transform_indices = @transform_1, window_bounds = array<i64: 8, 4>}, {pipeline_mode = #tpu.pipeline_mode<synchronous>, transform_indices = @transform_2, window_bounds = array<i64: 8, 1>}, {pipeline_mode = #tpu.pipeline_mode<synchronous>, transform_indices = @transform_3, window_bounds = array<i64: 16, 8>}, {pipeline_mode = #tpu.pipeline_mode<synchronous>, transform_indices = @transform_4, window_bounds = array<i64: 16, 1>}, {pipeline_mode = #tpu.pipeline_mode<synchronous>, transform_indices = @transform_5, window_bounds = array<i64: 3, 16>}, {pipeline_mode = #tpu.pipeline_mode<synchronous>, transform_indices = @transform_6, window_bounds = array<i64: 3, 1>}, {transform_indices = @transform_7, window_bounds = array<i64: 3, 128>}]} {
    %c0 = arith.constant 0 : index
    %c0_0 = arith.constant 0 : index
    %0 = vector.load %arg1[%c0, %c0_0] : memref<4x128xf32, #tpu.memory_space<vmem>>, vector<4x128xf32>
    %c0_1 = arith.constant 0 : index
    %c0_2 = arith.constant 0 : index
    %1 = vector.load %arg2[%c0_1, %c0_2] : memref<8x4xf32, #tpu.memory_space<vmem>>, vector<8x4xf32>
    %cst = arith.constant dense<0.000000e+00> : vector<8x128xf32>
    %2 = tpu.matmul %1, %0, %cst {dimension_numbers = #tpu.dot_dimension_numbers<[1], [0], [0], [1], [0, 0, 1, 1], [], []>} : vector<8x4xf32>, vector<4x128xf32>, vector<8x128xf32> -> vector<8x128xf32>
    %c0_3 = arith.constant 0 : index
    %c0_4 = arith.constant 0 : index
    %3 = vector.load %arg3[%c0_3, %c0_4] : memref<8x1xf32, #tpu.memory_space<vmem>>, vector<8x1xf32>
    %4 = vector.broadcast %3 : vector<8x1xf32> to vector<8x128xf32>
    %5 = arith.addf %2, %4 : vector<8x128xf32>
    %cst_5 = arith.constant 0.000000e+00 : f32
    %6 = vector.broadcast %cst_5 : f32 to vector<8x128xf32>
    %7 = arith.maximumf %5, %6 : vector<8x128xf32>
    %c0_6 = arith.constant 0 : index
    %c0_7 = arith.constant 0 : index
    %8 = vector.load %arg4[%c0_6, %c0_7] : memref<16x8xf32, #tpu.memory_space<vmem>>, vector<16x8xf32>
    %cst_8 = arith.constant dense<0.000000e+00> : vector<16x128xf32>
    %9 = tpu.matmul %8, %7, %cst_8 {dimension_numbers = #tpu.dot_dimension_numbers<[1], [0], [0], [1], [0, 0, 1, 1], [], []>} : vector<16x8xf32>, vector<8x128xf32>, vector<16x128xf32> -> vector<16x128xf32>
    %c0_9 = arith.constant 0 : index
    %c0_10 = arith.constant 0 : index
    %10 = vector.load %arg5[%c0_9, %c0_10] : memref<16x1xf32, #tpu.memory_space<vmem>>, vector<16x1xf32>
    %11 = vector.broadcast %10 : vector<16x1xf32> to vector<16x128xf32>
    %12 = arith.addf %9, %11 : vector<16x128xf32>
    %cst_11 = arith.constant 0.000000e+00 : f32
    %13 = vector.broadcast %cst_11 : f32 to vector<16x128xf32>
    %14 = arith.maximumf %12, %13 : vector<16x128xf32>
    %c0_12 = arith.constant 0 : index
    %c0_13 = arith.constant 0 : index
    %15 = vector.load %arg6[%c0_12, %c0_13] : memref<3x16xf32, #tpu.memory_space<vmem>>, vector<3x16xf32>
    %cst_14 = arith.constant dense<0.000000e+00> : vector<3x128xf32>
    %16 = tpu.matmul %15, %14, %cst_14 {dimension_numbers = #tpu.dot_dimension_numbers<[1], [0], [0], [1], [0, 0, 1, 1], [], []>} : vector<3x16xf32>, vector<16x128xf32>, vector<3x128xf32> -> vector<3x128xf32>
    %c0_15 = arith.constant 0 : index
    %c0_16 = arith.constant 0 : index
    %17 = vector.load %arg7[%c0_15, %c0_16] : memref<3x1xf32, #tpu.memory_space<vmem>>, vector<3x1xf32>
    %18 = vector.broadcast %17 : vector<3x1xf32> to vector<3x128xf32>
    %19 = arith.addf %16, %18 : vector<3x128xf32>
    %c0_17 = arith.constant 0 : index
    %c0_18 = arith.constant 0 : index
    %20 = vector.load %arg8[%c0_17, %c0_18] : memref<3x128xf32, #tpu.memory_space<vmem>>, vector<3x128xf32>
    tpu.vector_store %arg8[%c0_17, %c0_18], %19 {strides = array<i32>} : memref<3x128xf32, #tpu.memory_space<vmem>>, vector<3x128xf32>,
    return
  }
  func.func @transform_0(%arg0: i32) -> (i32, i32) {
    %c0_i32 = arith.constant 0 : i32
    %c0_i32_0 = arith.constant 0 : i32
    return %c0_i32, %arg0 : i32, i32
  }
  func.func @transform_1(%arg0: i32) -> (i32, i32) {
    %c0_i32 = arith.constant 0 : i32
    %c0_i32_0 = arith.constant 0 : i32
    %c0_i32_1 = arith.constant 0 : i32
    return %c0_i32, %c0_i32_0 : i32, i32
  }
  func.func @transform_2(%arg0: i32) -> (i32, i32) {
    %c0_i32 = arith.constant 0 : i32
    %c0_i32_0 = arith.constant 0 : i32
    %c0_i32_1 = arith.constant 0 : i32
    return %c0_i32, %c0_i32_0 : i32, i32
  }
  func.func @transform_3(%arg0: i32) -> (i32, i32) {
    %c0_i32 = arith.constant 0 : i32
    %c0_i32_0 = arith.constant 0 : i32
    %c0_i32_1 = arith.constant 0 : i32
    return %c0_i32, %c0_i32_0 : i32, i32
  }
  func.func @transform_4(%arg0: i32) -> (i32, i32) {
    %c0_i32 = arith.constant 0 : i32
    %c0_i32_0 = arith.constant 0 : i32
    %c0_i32_1 = arith.constant 0 : i32
    return %c0_i32, %c0_i32_0 : i32, i32
  }
  func.func @transform_5(%arg0: i32) -> (i32, i32) {
    %c0_i32 = arith.constant 0 : i32
    %c0_i32_0 = arith.constant 0 : i32
    %c0_i32_1 = arith.constant 0 : i32
    return %c0_i32, %c0_i32_0 : i32, i32
  }
  func.func @transform_6(%arg0: i32) -> (i32, i32) {
    %c0_i32 = arith.constant 0 : i32
    %c0_i32_0 = arith.constant 0 : i32
    %c0_i32_1 = arith.constant 0 : i32
    return %c0_i32, %c0_i32_0 : i32, i32
  }
  func.func @transform_7(%arg0: i32) -> (i32, i32) {
    %c0_i32 = arith.constant 0 : i32
    %c0_i32_0 = arith.constant 0 : i32
    return %c0_i32, %arg0 : i32, i32
  }
}

</mosaic_0001>

<llo_original>
// kernel: tpu_custom_call.1
$region0: #{tpu_custom_call.1}
  #allocation0 [shape = 'u32[]', space=smem, size = 0x4, offset = 0x4, fixed_abs, tag = 'smem constant byte address 0x4 - core index']
  #allocation1 [shape = 'u32[144,128]{1,0:T(1,128)}', space=vmem, size = 0x12000, scoped, tag = 'internal scratch']
  %s0 = inlined_call_operand.vmem [shape: f32[4,128], index: 0, kind: input, shape index: {}]
  %s1 = inlined_call_operand.vmem [shape: f32[8,4], index: 1, kind: input, shape index: {}]
  %s2 = inlined_call_operand.vmem [shape: f32[8,1], index: 2, kind: input, shape index: {}]
  %s3 = inlined_call_operand.vmem [shape: f32[16,8], index: 3, kind: input, shape index: {}]
  %s4 = inlined_call_operand.vmem [shape: f32[16,1], index: 4, kind: input, shape index: {}]
  %s5 = inlined_call_operand.vmem [shape: f32[3,16], index: 5, kind: input, shape index: {}]
  %s6 = inlined_call_operand.vmem [shape: f32[3,1], index: 6, kind: input, shape index: {}]
  %s7 = inlined_call_operand.hbm [shape: f32[3,128], index: 7, kind: output, shape index: {}]
  %s8 = sld [smem:[#allocation0]]
  $region38: #{tpu_custom_call.1} parent=0
    _
  %s10 = ssub.s32 1, %s8
  %s11 = scalar_select 0, %s10, %s8
  $region1: #{tpu_custom_call.1} parent=0
    #allocation2 [shape = 'u8[2048]{0}', space=vmem, size = 0x800, scoped, tag = 'output window, operand 0, single buffered']
    #allocation3 [shape = 's32[1]{0}', space=sflag, size = 0x4, scoped, tag = 'scoped memory for tpu_custom_call.1']
    %12 = vsyncpa [#allocation3], 0
    // Predicated region
    $region2: #{tpu_custom_call.1} parent=1 // pred_check
      _
    $region3: #{tpu_custom_call.1} parent=1 // pred_check_branch
      %14 = sbr.rel (0) target = $region5
    $region4: #{tpu_custom_call.1} parent=1 // pred_region
      _
    $region5: #{tpu_custom_call.1} parent=1 // pred_fallthru
      _
    // Predicated region
    $region6: #{tpu_custom_call.1} parent=1 // pred_check
      _
    $region7: #{tpu_custom_call.1} parent=1 // pred_check_branch
      %16 = sbr.rel (0) target = $region9
    $region8: #{tpu_custom_call.1} parent=1 // pred_region
      _
    $region9: #{tpu_custom_call.1} parent=1 // pred_fallthru
      _
    // Predicated region
    $region10: #{tpu_custom_call.1} parent=1 // pred_check
      _
    $region11: #{tpu_custom_call.1} parent=1 // pred_check_branch
      %18 = sbr.rel (0) target = $region13
    $region12: #{tpu_custom_call.1} parent=1 // pred_region
      _
    $region13: #{tpu_custom_call.1} parent=1 // pred_fallthru
      _
    // Predicated region
    $region14: #{tpu_custom_call.1} parent=1 // pred_check
      _
    $region15: #{tpu_custom_call.1} parent=1 // pred_check_branch
      %20 = sbr.rel (0) target = $region17
    $region16: #{tpu_custom_call.1} parent=1 // pred_region
      _
    $region17: #{tpu_custom_call.1} parent=1 // pred_fallthru
      _
    // Predicated region
    $region18: #{tpu_custom_call.1} parent=1 // pred_check
      _
    $region19: #{tpu_custom_call.1} parent=1 // pred_check_branch
      %22 = sbr.rel (0) target = $region21
    $region20: #{tpu_custom_call.1} parent=1 // pred_region
      _
    $region21: #{tpu_custom_call.1} parent=1 // pred_fallthru
      _
    // Predicated region
    $region22: #{tpu_custom_call.1} parent=1 // pred_check
      _
    $region23: #{tpu_custom_call.1} parent=1 // pred_check_branch
      %24 = sbr.rel (0) target = $region25
    $region24: #{tpu_custom_call.1} parent=1 // pred_region
      _
    $region25: #{tpu_custom_call.1} parent=1 // pred_fallthru
      _
    // Predicated region
    $region26: #{tpu_custom_call.1} parent=1 // pred_check
      _
    $region27: #{tpu_custom_call.1} parent=1 // pred_check_branch
      %26 = sbr.rel (0) target = $region29
    $region28: #{tpu_custom_call.1} parent=1 // pred_region
      _
    $region29: #{tpu_custom_call.1} parent=1 // pred_fallthru
      _
    %v27 = vld [vmem:[%s0] sm:$0xf]
    %v28 = vld [vmem:[%s1] sm:$0xff]
    %v29 = vld [vmem:[%s2] sm:$0xff]
    %31 = vset.pattern.permute.xlu0 0
    %32 = vperm.xlu0 %31, %v29
    %v33 = vpop.permute.xlu0 %32
    %vm35 = vcmask 31744
    %v37 = vsel %vm35, %v28, 0
    %vm39 = vcmask 1043456
    %v41 = vsel %vm39, %v27, 0
    %43 = vmatprep.subr.mxu0 0.0
    %44 = vmatpush1.msra.mxu0 %v41
    %45 = vmatprep.subr.mxu0 0.0
    %46 = vmatpush1.msra.mxu0 0.0
    %47 = vmatprep.subr.mxu0 0.0
    %48 = vmatpush1.msra.mxu0 0.0
    %49 = vmatprep.subr.mxu0 0.0
    %50 = vmatpush1.msra.mxu0 0.0
    %51 = vmatprep.subr.mxu0 0.0
    %52 = vmatpush1.msra.mxu0 0.0
    %53 = vmatprep.subr.mxu0 0.0
    %54 = vmatpush1.msra.mxu0 0.0
    %55 = vmatprep.subr.mxu0 0.0
    %56 = vmatpush1.msra.mxu0 0.0
    %57 = vmatprep.subr.mxu0 0.0
    %58 = vmatpush1.msra.mxu0 0.0
    %59 = vmatprep.subr.mxu0 0.0
    %60 = vmatpush1.msra.mxu0 0.0
    %61 = vmatprep.subr.mxu0 0.0
    %62 = vmatpush1.msra.mxu0 0.0
    %63 = vmatprep.subr.mxu0 0.0
    %64 = vmatpush1.msra.mxu0 0.0
    %65 = vmatprep.subr.mxu0 0.0
    %66 = vmatpush1.msra.mxu0 0.0
    %67 = vmatprep.subr.mxu0 0.0
    %68 = vmatpush1.msra.mxu0 0.0
    %69 = vmatprep.subr.mxu0 0.0
    %70 = vmatpush1.msra.mxu0 0.0
    %71 = vmatprep.subr.mxu0 0.0
    %72 = vmatpush1.msra.mxu0 0.0
    %73 = vmatprep.subr.mxu0 0.0
    %74 = vmatpush1.msra.mxu0 0.0
    %75 = vmatprep.subr.mxu0 0.0
    %76 = vmatpush1.msra.mxu0 0.0
    %77 = vmatprep.subr.mxu0 0.0
    %78 = vmatpush1.msra.mxu0 0.0
    %79 = vmatprep.subr.mxu0 0.0
    %80 = vmatpush1.msra.mxu0 0.0
    %81 = vmatprep.subr.mxu0 0.0
    %82 = vmatpush1.msra.mxu0 0.0
    %83 = vmatprep.subr.mxu0 0.0
    %84 = vmatpush1.msra.mxu0 0.0
    %85 = vmatprep.subr.mxu0 0.0
    %86 = vmatpush1.msra.mxu0 0.0
    %87 = vmatprep.subr.mxu0 0.0
    %88 = vmatpush1.msra.mxu0 0.0
    %89 = vmatprep.subr.mxu0 0.0
    %90 = vmatpush1.msra.mxu0 0.0
    %91 = vmatprep.subr.mxu0 0.0
    %92 = vmatpush1.msra.mxu0 0.0
    %93 = vmatprep.subr.mxu0 0.0
    %94 = vmatpush1.msra.mxu0 0.0
    %95 = vmatprep.subr.mxu0 0.0
    %96 = vmatpush1.msra.mxu0 0.0
    %97 = vmatprep.subr.mxu0 0.0
    %98 = vmatpush1.msra.mxu0 0.0
    %99 = vmatprep.subr.mxu0 0.0
    %100 = vmatpush1.msra.mxu0 0.0
    %101 = vmatprep.subr.mxu0 0.0
    %102 = vmatpush1.msra.mxu0 0.0
    %103 = vmatprep.subr.mxu0 0.0
    %104 = vmatpush1.msra.mxu0 0.0
    %105 = vmatprep.subr.mxu0 0.0
    %106 = vmatpush1.msra.mxu0 0.0
    %107 = vmatprep.mubr.f32.mxu0 0.0
    %108 = vmatmul.mubr.f32.gmra.mrb[0].mxu0 %v37
    %v109 = vpop.f32.mrb[0].mxu0
    %v110 = vadd.f32 %v33, %v109
    %v111 = vpop.f32.mrb[0].mxu0
    %112 = vdwg.mxu0
    %v113 = vmax.f32 %v110, 0.0
    %v114 = vld [vmem:[%s3] sm:$0xff]
    %v115 = vld [vmem:[%s3 + $0x8] sm:$0xff]
    %v116 = vld [vmem:[%s4] sm:$0xff]
    %v117 = vld [vmem:[%s4 + $0x8] sm:$0xff]
    %119 = vset.pattern.permute.xlu0 0
    %120 = vperm.xlu0 %119, %v116
    %v121 = vpop.permute.xlu0 %120
    %124 = vset.pattern.permute.xlu0 0
    %125 = vperm.xlu0 %124, %v117
    %v126 = vpop.permute.xlu0 %125
    %vm128 = vcmask 64512
    %v130 = vsel %vm128, %v114, 0
    %v133 = vsel %vm128, %v115, 0
    %135 = vmatprep.subr.mxu0 0.0
    %136 = vmatpush1.msra.mxu0 %v113
    %137 = vmatprep.subr.mxu0 0.0
    %138 = vmatpush1.msra.mxu0 0.0
    %139 = vmatprep.subr.mxu0 0.0
    %140 = vmatpush1.msra.mxu0 0.0
    %141 = vmatprep.subr.mxu0 0.0
    %142 = vmatpush1.msra.mxu0 0.0
    %143 = vmatprep.subr.mxu0 0.0
    %144 = vmatpush1.msra.mxu0 0.0
    %145 = vmatprep.subr.mxu0 0.0
    %146 = vmatpush1.msra.mxu0 0.0
    %147 = vmatprep.subr.mxu0 0.0
    %148 = vmatpush1.msra.mxu0 0.0
    %149 = vmatprep.subr.mxu0 0.0
    %150 = vmatpush1.msra.mxu0 0.0
    %151 = vmatprep.subr.mxu0 0.0
    %152 = vmatpush1.msra.mxu0 0.0
    %153 = vmatprep.subr.mxu0 0.0
    %154 = vmatpush1.msra.mxu0 0.0
    %155 = vmatprep.subr.mxu0 0.0
    %156 = vmatpush1.msra.mxu0 0.0
    %157 = vmatprep.subr.mxu0 0.0
    %158 = vmatpush1.msra.mxu0 0.0
    %159 = vmatprep.subr.mxu0 0.0
    %160 = vmatpush1.msra.mxu0 0.0
    %161 = vmatprep.subr.mxu0 0.0
    %162 = vmatpush1.msra.mxu0 0.0
    %163 = vmatprep.subr.mxu0 0.0
    %164 = vmatpush1.msra.mxu0 0.0
    %165 = vmatprep.subr.mxu0 0.0
    %166 = vmatpush1.msra.mxu0 0.0
    %167 = vmatprep.subr.mxu0 0.0
    %168 = vmatpush1.msra.mxu0 0.0
    %169 = vmatprep.subr.mxu0 0.0
    %170 = vmatpush1.msra.mxu0 0.0
    %171 = vmatprep.subr.mxu0 0.0
    %172 = vmatpush1.msra.mxu0 0.0
    %173 = vmatprep.subr.mxu0 0.0
    %174 = vmatpush1.msra.mxu0 0.0
    %175 = vmatprep.subr.mxu0 0.0
    %176 = vmatpush1.msra.mxu0 0.0
    %177 = vmatprep.subr.mxu0 0.0
    %178 = vmatpush1.msra.mxu0 0.0
    %179 = vmatprep.subr.mxu0 0.0
    %180 = vmatpush1.msra.mxu0 0.0
    %181 = vmatprep.subr.mxu0 0.0
    %182 = vmatpush1.msra.mxu0 0.0
    %183 = vmatprep.subr.mxu0 0.0
    %184 = vmatpush1.msra.mxu0 0.0
    %185 = vmatprep.subr.mxu0 0.0
    %186 = vmatpush1.msra.mxu0 0.0
    %187 = vmatprep.subr.mxu0 0.0
    %188 = vmatpush1.msra.mxu0 0.0
    %189 = vmatprep.subr.mxu0 0.0
    %190 = vmatpush1.msra.mxu0 0.0
    %191 = vmatprep.subr.mxu0 0.0
    %192 = vmatpush1.msra.mxu0 0.0
    %193 = vmatprep.subr.mxu0 0.0
    %194 = vmatpush1.msra.mxu0 0.0
    %195 = vmatprep.subr.mxu0 0.0
    %196 = vmatpush1.msra.mxu0 0.0
    %197 = vmatprep.subr.mxu0 0.0
    %198 = vmatpush1.msra.mxu0 0.0
    %199 = vmatprep.mubr.f32.mxu0 0.0
    %200 = vmatmul.mubr.f32.gmra.mrb[0].mxu0 %v130
    %v201 = vpop.f32.mrb[0].mxu0
    %v202 = vadd.f32 %v121, %v201
    %v203 = vpop.f32.mrb[0].mxu0
    %204 = vmatprep.mubr.f32.mxu0 0.0
    %205 = vmatmul.mubr.f32.gmra.mrb[0].mxu0 %v133
    %v206 = vpop.f32.mrb[0].mxu0
    %v207 = vadd.f32 %v126, %v206
    %v208 = vpop.f32.mrb[0].mxu0
    %209 = vdwg.mxu0
    %v210 = vmax.f32 %v202, 0.0
    %v211 = vmax.f32 %v207, 0.0
    %v212 = vld [vmem:[%s5] sm:$0x7]
    %v213 = vld [vmem:[%s6] sm:$0x7]
    %215 = vset.pattern.permute.xlu0 0
    %216 = vperm.xlu0 %215, %v213
    %v217 = vpop.permute.xlu0 %216
    %vm219 = vcmask 130048
    %v221 = vsel %vm219, %v212, 0
    %223 = vmatprep.subr.mxu0 0.0
    %224 = vmatpush1.msra.mxu0 %v210
    %225 = vmatprep.subr.mxu0 0.0
    %226 = vmatpush1.msra.mxu0 %v211
    %227 = vmatprep.subr.mxu0 0.0
    %228 = vmatpush1.msra.mxu0 0.0
    %229 = vmatprep.subr.mxu0 0.0
    %230 = vmatpush1.msra.mxu0 0.0
    %231 = vmatprep.subr.mxu0 0.0
    %232 = vmatpush1.msra.mxu0 0.0
    %233 = vmatprep.subr.mxu0 0.0
    %234 = vmatpush1.msra.mxu0 0.0
    %235 = vmatprep.subr.mxu0 0.0
    %236 = vmatpush1.msra.mxu0 0.0
    %237 = vmatprep.subr.mxu0 0.0
    %238 = vmatpush1.msra.mxu0 0.0
    %239 = vmatprep.subr.mxu0 0.0
    %240 = vmatpush1.msra.mxu0 0.0
    %241 = vmatprep.subr.mxu0 0.0
    %242 = vmatpush1.msra.mxu0 0.0
    %243 = vmatprep.subr.mxu0 0.0
    %244 = vmatpush1.msra.mxu0 0.0
    %245 = vmatprep.subr.mxu0 0.0
    %246 = vmatpush1.msra.mxu0 0.0
    %247 = vmatprep.subr.mxu0 0.0
    %248 = vmatpush1.msra.mxu0 0.0
    %249 = vmatprep.subr.mxu0 0.0
    %250 = vmatpush1.msra.mxu0 0.0
    %251 = vmatprep.subr.mxu0 0.0
    %252 = vmatpush1.msra.mxu0 0.0
    %253 = vmatprep.subr.mxu0 0.0
    %254 = vmatpush1.msra.mxu0 0.0
    %255 = vmatprep.subr.mxu0 0.0
    %256 = vmatpush1.msra.mxu0 0.0
    %257 = vmatprep.subr.mxu0 0.0
    %258 = vmatpush1.msra.mxu0 0.0
    %259 = vmatprep.subr.mxu0 0.0
    %260 = vmatpush1.msra.mxu0 0.0
    %261 = vmatprep.subr.mxu0 0.0
    %262 = vmatpush1.msra.mxu0 0.0
    %263 = vmatprep.subr.mxu0 0.0
    %264 = vmatpush1.msra.mxu0 0.0
    %265 = vmatprep.subr.mxu0 0.0
    %266 = vmatpush1.msra.mxu0 0.0
    %267 = vmatprep.subr.mxu0 0.0
    %268 = vmatpush1.msra.mxu0 0.0
    %269 = vmatprep.subr.mxu0 0.0
    %270 = vmatpush1.msra.mxu0 0.0
    %271 = vmatprep.subr.mxu0 0.0
    %272 = vmatpush1.msra.mxu0 0.0
    %273 = vmatprep.subr.mxu0 0.0
    %274 = vmatpush1.msra.mxu0 0.0
    %275 = vmatprep.subr.mxu0 0.0
    %276 = vmatpush1.msra.mxu0 0.0
    %277 = vmatprep.subr.mxu0 0.0
    %278 = vmatpush1.msra.mxu0 0.0
    %279 = vmatprep.subr.mxu0 0.0
    %280 = vmatpush1.msra.mxu0 0.0
    %281 = vmatprep.subr.mxu0 0.0
    %282 = vmatpush1.msra.mxu0 0.0
    %283 = vmatprep.subr.mxu0 0.0
    %284 = vmatpush1.msra.mxu0 0.0
    %285 = vmatprep.subr.mxu0 0.0
    %286 = vmatpush1.msra.mxu0 0.0
    %287 = vmatprep.mubr.f32.mxu0 0.0
    %288 = vmatmul.mubr.f32.gmra.mrb[0].mxu0 %v221
    %v289 = vpop.f32.mrb[0].mxu0
    %v290 = vadd.f32 %v217, %v289
    %v291 = vpop.f32.mrb[0].mxu0
    %292 = vdwg.mxu0
    %293 = vst [vmem:[#allocation2] sm:$0x7] %v290
    // Predicated region
    $region30: #{tpu_custom_call.1} parent=1 // pred_check
      _
    $region31: #{tpu_custom_call.1} parent=1 // pred_check_branch
      %295 = sbr.rel (0) target = $region33
    $region32: #{tpu_custom_call.1} parent=1 // pred_region
      %s297 = ssub.s32 64, 64
      %298 = vsyncadd [#allocation3], %s297
      %s300 = sshll.u32 [#allocation2], 4
      %s301 = int_to_ptr.vmem [resolvable:$true] %s300
      %303 = dma.vmem_to_hbm [thread:$0]  %s301, 64, %s7, [#allocation3]
    $region33: #{tpu_custom_call.1} parent=1 // pred_fallthru
      _
    // Predicated region
    $region34: #{tpu_custom_call.1} parent=1 // pred_check
      _
    $region35: #{tpu_custom_call.1} parent=1 // pred_check_branch
      %305 = sbr.rel (0) target = $region37
    $region36: #{tpu_custom_call.1} parent=1 // pred_region
      %306 = dma.done [#allocation3], 64
    $region37: #{tpu_custom_call.1} parent=1 // pred_fallthru
      _
    %307 = vsyncpa [#allocation3], 1

</llo_original>
